<compile_context>
chip_gen: v7x
topology: tpu7x:2x2x1
jax: 0.10.0
libtpu: 0.0.40
codegen_flags: <defaults>
</compile_context>

<pallas_src>
import functools

import jax
import jax.numpy as jnp
from jax.experimental import pallas as pl
from jax.experimental.pallas import tpu as pltpu

GAMMA = 0.0  # matches ALE_loss(gamma=0.0) default

_LANES = 128
_SUBLANES = 8
# ~4 MiB per operand tile -> 3 operands x 2 pipeline buffers ~= 24 MiB VMEM.
_TARGET_TILE_BYTES = 4 << 20
# Explicit scoped-VMEM budget: above v5e's 16 MiB default, under v7x's 64 MiB.
_VMEM_LIMIT_BYTES = 40 << 20


def _weight_pow(absval, gamma):
    """absval ** gamma, shared by the kernel and the jnp tail path.

    Returns None when gamma == 0 (weight is identically 1.0, matching
    torch.pow(x, 0.0) == 1.0 even at x == 0). Small integer gammas use
    repeated multiplies instead of exp(g*log(x)) to avoid two extra EUP
    transcendentals and the absval == 0 corner case.
    """
    g = float(gamma)
    if g == 0.0:
        return None
    if g == int(g) and 1.0 <= g <= 4.0:
        w = absval
        for _ in range(int(g) - 1):
            w = w * absval
        return w
    return absval ** g


def _ale_loss_kernel(out_ref, tgt_ref, res_ref, *, gamma):
    # Compute in f32 regardless of storage dtype (required on v5e; better log
    # accuracy everywhere); cast back only at the final store.
    o = out_ref[...].astype(jnp.float32)
    t = tgt_ref[...].astype(jnp.float32)
    absval = jnp.abs(o - t)
    # log1p(-x) == log(1 - x): same EUP cost, much better accuracy for small x.
    neg_log = -jnp.log1p(-absval)
    w = _weight_pow(absval, gamma)
    res = neg_log if w is None else neg_log * w
    res_ref[...] = res.astype(res_ref.dtype)


def _ale_loss_tail(o, t, gamma, dtype):
    """Plain-jnp path for the (<128 element) ragged tail."""
    o32 = o.astype(jnp.float32)
    t32 = t.astype(jnp.float32)
    absval = jnp.abs(o32 - t32)
    neg_log = -jnp.log1p(-absval)
    w = _weight_pow(absval, gamma)
    res = neg_log if w is None else neg_log * w
    return res.astype(dtype)


@functools.lru_cache(maxsize=None)
def _num_tensorcores():
    """Best-effort TensorCore count for the local chip (v7x has 2, v5e/v6e 1)."""
    try:
        info = pltpu.get_tpu_info()
        for attr in ("num_cores", "core_count", "num_tensorcores",
                     "tensorcore_count"):
            v = getattr(info, attr, None)
            if isinstance(v, int) and v > 0:
                return v
    except Exception:
        pass
    try:
        v = getattr(jax.devices()[0], "num_cores", None)
        if isinstance(v, int) and v > 0:
            return v
    except Exception:
        pass
    return 1


def _pick_width(n):
    """Largest lane-dense width that divides n (prefer one leaving >= 16 rows)."""
    for w in (1024, 512, 256, 128):
        if n % w == 0 and n // w >= 2 * _SUBLANES:
            return w
    for w in (1024, 512, 256, 128):
        if n % w == 0:
            return w
    return None


def _pick_tile_rows(rows, width, itemsize, num_cores):
    """Row-tile: ~4 MiB per operand, multiple of 8; split tiny inputs only if >=2 TCs."""
    target_rows = max(
        _SUBLANES,
        (_TARGET_TILE_BYTES // (width * itemsize)) // _SUBLANES * _SUBLANES,
    )
    if rows > target_rows:
        return target_rows  # grid = cdiv(rows, tr) >= 2 automatically
    if num_cores >= 2 and rows >= 2 * _SUBLANES:
        # Only worth an extra grid step when a second TensorCore can take it.
        half = (rows + 1) // 2
        return -(-half // _SUBLANES) * _SUBLANES
    return rows  # single full-extent block (equals full dim, so always legal)


def _ale_loss_pallas_2d(out2d, tgt2d, gamma, dtype, itemsize):
    rows, width = out2d.shape
    tr = _pick_tile_rows(rows, width, itemsize, _num_tensorcores())
    grid = (pl.cdiv(rows, tr),)
    n_main = rows * width

    kernel = functools.partial(_ale_loss_kernel, gamma=gamma)
    cost = pl.CostEstimate(
        flops=3 * n_main,                      # sub / abs / mul (rough)
        transcendentals=n_main,                # one log per element
        bytes_accessed=3 * n_main * itemsize,  # 2 reads + 1 write
    )

    return pl.pallas_call(
        kernel,
        out_shape=jax.ShapeDtypeStruct((rows, width), dtype),
        grid_spec=pltpu.PrefetchScalarGridSpec(
            num_scalar_prefetch=0,
            grid=grid,
            in_specs=[
                pl.BlockSpec((tr, width), lambda i: (i, 0)),
                pl.BlockSpec((tr, width), lambda i: (i, 0)),
            ],
            out_specs=pl.BlockSpec((tr, width), lambda i: (i, 0)),
        ),
        compiler_params=pltpu.CompilerParams(
            dimension_semantics=("parallel",),
            vmem_limit_bytes=_VMEM_LIMIT_BYTES,
        ),
        cost_estimate=cost,
    )(out2d, tgt2d)


def ale_loss(output, target, gamma=GAMMA):
    """Elementwise ALE loss; returns an array with the same shape/dtype as `output`."""
    assert output.shape == target.shape
    orig_shape = output.shape
    dtype = output.dtype
    itemsize = jnp.dtype(dtype).itemsize
    n = output.size

    flat_o = output.reshape(-1)
    flat_t = target.reshape(-1)

    width = _pick_width(n)
    if width is not None:
        n_main, n_tail = n, 0
    else:
        # Ragged fallback: no jnp.pad / output slice (that tripled HBM traffic).
        # Run Pallas on the 128-aligned prefix, do the <128-element tail in jnp.
        width = _LANES
        n_main = (n // _LANES) * _LANES
        n_tail = n - n_main

    parts = []
    if n_main:
        rows = n_main // width
        out2d = flat_o[:n_main].reshape(rows, width)
        tgt2d = flat_t[:n_main].reshape(rows, width)
        res2d = _ale_loss_pallas_2d(out2d, tgt2d, gamma, dtype, itemsize)
        parts.append(res2d.reshape(-1))
    if n_tail:
        parts.append(
            _ale_loss_tail(flat_o[n_main:], flat_t[n_main:], gamma, dtype))

    flat_res = parts[0] if len(parts) == 1 else jnp.concatenate(parts)
    return flat_res.reshape(orig_shape)


if __name__ == "__main__":
    key = jax.random.PRNGKey(0)
    k1, k2, k3, k4 = jax.random.split(key, 4)

    B, C, H, W = 2, 4, 16, 16  # NCHW, small
    # keep |output - target| < 1 so log(1 - absval) stays finite (same domain
    # assumption the PyTorch module relies on)
    output = jax.random.uniform(k1, (B, C, H, W), jnp.float32, minval=0.0, maxval=0.49)
    target = jax.random.uniform(k2, (B, C, H, W), jnp.float32, minval=0.0, maxval=0.49)

    absval = jnp.abs(output - target)

    # gamma = 0.0 (module default)
    result = jax.block_until_ready(ale_loss(output, target))
    ref0 = -jnp.log(1.0 - absval)
    assert result.shape == output.shape and result.dtype == output.dtype
    assert jnp.allclose(result, ref0, atol=1e-5, rtol=1e-5)

    # gamma = 2.0 (exercise the integer-gamma fast path)
    result2 = jax.block_until_ready(ale_loss(output, target, gamma=2.0))
    ref2 = -jnp.log(1.0 - absval) * absval ** 2.0
    assert jnp.allclose(result2, ref2, atol=1e-5, rtol=1e-5)

    # Ragged size (505 elements): exercises the prefix (Pallas) + tail (jnp) path.
    ro = jax.random.uniform(k3, (5, 101), jnp.float32, minval=0.0, maxval=0.49)
    rt = jax.random.uniform(k4, (5, 101), jnp.float32, minval=0.0, maxval=0.49)
    rres = jax.block_until_ready(ale_loss(ro, rt))
    rabs = jnp.abs(ro - rt)
    rref = -jnp.log(1.0 - rabs)
    assert rres.shape == ro.shape and rres.dtype == ro.dtype
    assert jnp.allclose(rres, rref, atol=1e-5, rtol=1e-5)

    print("KERNEL_OK")
</pallas_src>

<mosaic_0001>
module attributes {stable_mosaic.version = 11 : i64} {
  func.func @_ale_loss_kernel(%arg0: i32, %arg1: memref<16x128xf32, #tpu.memory_space<vmem>>, %arg2: memref<16x128xf32, #tpu.memory_space<vmem>>, %arg3: memref<16x128xf32, #tpu.memory_space<vmem>>) attributes {dimension_semantics = [#tpu.dimension_semantics<parallel>], iteration_bounds = array<i64: 1>, scalar_prefetch = 0 : i64, scratch_operands = 0 : i64, tpu.core_type = #tpu.core_type<tc>, window_params = [{transform_indices = @transform_0, window_bounds = array<i64: 16, 128>}, {transform_indices = @transform_1, window_bounds = array<i64: 16, 128>}, {transform_indices = @transform_2, window_bounds = array<i64: 16, 128>}]} {
    %c0 = arith.constant 0 : index
    %c0_0 = arith.constant 0 : index
    %0 = vector.load %arg1[%c0, %c0_0] : memref<16x128xf32, #tpu.memory_space<vmem>>, vector<16x128xf32>
    %c0_1 = arith.constant 0 : index
    %c0_2 = arith.constant 0 : index
    %1 = vector.load %arg2[%c0_1, %c0_2] : memref<16x128xf32, #tpu.memory_space<vmem>>, vector<16x128xf32>
    %2 = arith.subf %0, %1 : vector<16x128xf32>
    %3 = math.absf %2 : vector<16x128xf32>
    %cst = arith.constant 0.000000e+00 : f32
    %4 = vector.broadcast %cst : f32 to vector<16x128xf32>
    %5 = arith.subf %4, %3 : vector<16x128xf32>
    %6 = math.log1p %5 : vector<16x128xf32>
    %cst_3 = arith.constant 0.000000e+00 : f32
    %7 = vector.broadcast %cst_3 : f32 to vector<16x128xf32>
    %8 = arith.subf %7, %6 : vector<16x128xf32>
    %c0_4 = arith.constant 0 : index
    %c0_5 = arith.constant 0 : index
    %9 = vector.load %arg3[%c0_4, %c0_5] : memref<16x128xf32, #tpu.memory_space<vmem>>, vector<16x128xf32>
    tpu.vector_store %arg3[%c0_4, %c0_5], %8 {strides = array<i32>} : memref<16x128xf32, #tpu.memory_space<vmem>>, vector<16x128xf32>,
    return
  }
  func.func @transform_0(%arg0: i32) -> (i32, i32) {
    %c0_i32 = arith.constant 0 : i32
    %c0_i32_0 = arith.constant 0 : i32
    return %arg0, %c0_i32 : i32, i32
  }
  func.func @transform_1(%arg0: i32) -> (i32, i32) {
    %c0_i32 = arith.constant 0 : i32
    %c0_i32_0 = arith.constant 0 : i32
    return %arg0, %c0_i32 : i32, i32
  }
  func.func @transform_2(%arg0: i32) -> (i32, i32) {
    %c0_i32 = arith.constant 0 : i32
    %c0_i32_0 = arith.constant 0 : i32
    return %arg0, %c0_i32 : i32, i32
  }
}

</mosaic_0001>

<llo_original>
// kernel: tpu_custom_call.1
$region0: #{tpu_custom_call.1}
  #allocation0 [shape = 'u32[]', space=smem, size = 0x4, offset = 0x4, fixed_abs, tag = 'smem constant byte address 0x4 - core index']
  #allocation1 [shape = 'u32[144,128]{1,0:T(1,128)}', space=vmem, size = 0x12000, scoped, tag = 'internal scratch']
  %s0 = inlined_call_operand.hbm [shape: f32[16,128], index: 0, kind: input, shape index: {}]
  %s1 = inlined_call_operand.hbm [shape: f32[16,128], index: 1, kind: input, shape index: {}]
  %s2 = inlined_call_operand.hbm [shape: f32[16,128], index: 2, kind: output, shape index: {}]
  %s3 = sld [smem:[#allocation0]]
  $region26: #{tpu_custom_call.1} parent=0
    _
  %s5 = ssub.s32 1, %s3
  %s6 = scalar_select 0, %s5, %s3
  $region1: #{tpu_custom_call.1} parent=0
    #allocation2 [shape = 'u8[8192]{0}', space=vmem, size = 0x2000, scoped, tag = 'input window, operand 0, single buffered']
    #allocation3 [shape = 's32[1]{0}', space=sflag, size = 0x4, scoped, tag = 'scoped memory for tpu_custom_call.1']
    #allocation4 [shape = 's32[1]{0}', space=sflag, size = 0x4, scoped, tag = 'scoped memory for tpu_custom_call.1']
    #allocation5 [shape = 'u8[8192]{0}', space=vmem, size = 0x2000, scoped, tag = 'input window, operand 1, single buffered']
    #allocation6 [shape = 's32[1]{0}', space=sflag, size = 0x4, scoped, tag = 'scoped memory for tpu_custom_call.1']
    #allocation7 [shape = 'u8[8192]{0}', space=vmem, size = 0x2000, scoped, tag = 'output window, operand 0, single buffered']
    %7 = vsyncpa [#allocation3], 0
    %8 = vsyncpa [#allocation6], 0
    %9 = vsyncpa [#allocation4], 0
    // Predicated region
    $region2: #{tpu_custom_call.1} parent=1 // pred_check
      _
    $region3: #{tpu_custom_call.1} parent=1 // pred_check_branch
      %11 = sbr.rel (0) target = $region5
    $region4: #{tpu_custom_call.1} parent=1 // pred_region
      %s13 = ssub.s32 256, 256
      %14 = vsyncadd [#allocation3], %s13
      %s15 = sshll.u32 [#allocation2], 4
      %s16 = int_to_ptr.vmem [resolvable:$true] %s15
      %21 = dma.hbm_to_vmem [thread:$0]  %s0, 256, %s16, [#allocation3], 128, 128, 8
    $region5: #{tpu_custom_call.1} parent=1 // pred_fallthru
      _
    // Predicated region
    $region6: #{tpu_custom_call.1} parent=1 // pred_check
      _
    $region7: #{tpu_custom_call.1} parent=1 // pred_check_branch
      %23 = sbr.rel (0) target = $region9
    $region8: #{tpu_custom_call.1} parent=1 // pred_region
      %s25 = ssub.s32 256, 256
      %26 = vsyncadd [#allocation6], %s25
      %s27 = sshll.u32 [#allocation5], 4
      %s28 = int_to_ptr.vmem [resolvable:$true] %s27
      %33 = dma.hbm_to_vmem [thread:$0]  %s1, 256, %s28, [#allocation6], 128, 128, 8
    $region9: #{tpu_custom_call.1} parent=1 // pred_fallthru
      _
    // Predicated region
    $region10: #{tpu_custom_call.1} parent=1 // pred_check
      _
    $region11: #{tpu_custom_call.1} parent=1 // pred_check_branch
      %35 = sbr.rel (0) target = $region13
    $region12: #{tpu_custom_call.1} parent=1 // pred_region
      %36 = dma.done [#allocation3], 256
    $region13: #{tpu_custom_call.1} parent=1 // pred_fallthru
      _
    // Predicated region
    $region14: #{tpu_custom_call.1} parent=1 // pred_check
      _
    $region15: #{tpu_custom_call.1} parent=1 // pred_check_branch
      %38 = sbr.rel (0) target = $region17
    $region16: #{tpu_custom_call.1} parent=1 // pred_region
      %39 = dma.done [#allocation6], 256
    $region17: #{tpu_custom_call.1} parent=1 // pred_fallthru
      _
    %v40 = vld [vmem:[#allocation2] sm:$0xff]
    %v41 = vld [vmem:[#allocation2 + $0x8] sm:$0xff]
    %v42 = vld [vmem:[#allocation5] sm:$0xff]
    %v43 = vld [vmem:[#allocation5 + $0x8] sm:$0xff]
    %v44 = vsub.f32 %v40, %v42
    %v45 = vsub.f32 %v41, %v43
    %v46 = vand.u32 2147483647, %v44
    %v47 = vand.u32 2147483647, %v45
    %v48 = vsub.f32 0.0, %v46
    %v49 = vsub.f32 0.0, %v47
    %v50 = vadd.f32 %v48, 1.0
    %v51 = vlog2.pop %v50
    %v52 = vmul.f32 %v51, 0.6931472
    %v53 = vmul.f32 -0.5, %v48
    %v54 = vadd.f32 %v53, 1.0
    %v55 = vmul.f32 %v54, %v48
    %v56 = vand.u32 2147483647, %v48
    %vm57 = vcmp.lt.f32.partialorder %v56, 0.0004427343
    %v58 = vsel %vm57, %v55, %v52
    %v59 = vadd.f32 %v49, 1.0
    %v60 = vlog2.pop %v59
    %v61 = vmul.f32 %v60, 0.6931472
    %v62 = vmul.f32 -0.5, %v49
    %v63 = vadd.f32 %v62, 1.0
    %v64 = vmul.f32 %v63, %v49
    %v65 = vand.u32 2147483647, %v49
    %vm66 = vcmp.lt.f32.partialorder %v65, 0.0004427343
    %v67 = vsel %vm66, %v64, %v61
    %v68 = vsub.f32 0.0, %v58
    %v69 = vsub.f32 0.0, %v67
    %70 = vst [vmem:[#allocation7] sm:$0xff] %v68
    %71 = vst [vmem:[#allocation7 + $0x8] sm:$0xff] %v69
    // Predicated region
    $region18: #{tpu_custom_call.1} parent=1 // pred_check
      _
    $region19: #{tpu_custom_call.1} parent=1 // pred_check_branch
      %73 = sbr.rel (0) target = $region21
    $region20: #{tpu_custom_call.1} parent=1 // pred_region
      %s75 = ssub.s32 256, 256
      %76 = vsyncadd [#allocation4], %s75
      %s77 = sshll.u32 [#allocation7], 4
      %s78 = int_to_ptr.vmem [resolvable:$true] %s77
      %83 = dma.vmem_to_hbm [thread:$0]  %s78, 256, %s2, [#allocation4], 128, 128, 8
    $region21: #{tpu_custom_call.1} parent=1 // pred_fallthru
      _
    // Predicated region
    $region22: #{tpu_custom_call.1} parent=1 // pred_check
      _
    $region23: #{tpu_custom_call.1} parent=1 // pred_check_branch
      %85 = sbr.rel (0) target = $region25
    $region24: #{tpu_custom_call.1} parent=1 // pred_region
      %86 = dma.done [#allocation4], 256
    $region25: #{tpu_custom_call.1} parent=1 // pred_fallthru
      _
    %87 = vsyncpa [#allocation3], 1
    %88 = vsyncpa [#allocation6], 1
    %89 = vsyncpa [#allocation4], 1

</llo_original>
